<compile_context>
chip_gen: v7x
topology: tpu7x:2x2x1
jax: 0.10.0
libtpu: 0.0.40
codegen_flags: <defaults>
</compile_context>

<pallas_src>
import functools

import jax
import jax.numpy as jnp
from jax.experimental import pallas as pl
from jax.experimental.pallas import tpu as pltpu


# --------------------------------------------------------------------------- #
# Kernels
# --------------------------------------------------------------------------- #
def _single_rank_kernel(paired_ref, unpaired_ref, out_ref, acc_ref, *,
                        margin, weight, inv_b):
    """acc += per-lane sums of relu(margin + unpaired - paired); finalize -> out."""
    step = pl.program_id(0)

    @pl.when(step == 0)
    def _init():
        acc_ref[...] = jnp.zeros_like(acc_ref)
        out_ref[...] = jnp.zeros_like(out_ref)

    paired = paired_ref[...].astype(jnp.float32)
    unpaired = unpaired_ref[...].astype(jnp.float32)
    hinge = jnp.maximum(unpaired - paired + margin, 0.0)
    acc_ref[...] += jnp.sum(hinge, axis=0, keepdims=True)

    @pl.when(step == pl.num_programs(0) - 1)
    def _finalize():
        out_ref[...] = (weight * inv_b) * jnp.sum(acc_ref[...], keepdims=True)


def _dual_rank_kernel(paired_ref, text_unp_ref, vis_unp_ref, out_ref,
                      vis_acc_ref, text_acc_ref, *,
                      margin, vis_weight, text_weight, inv_b):
    """Two hinge terms sharing (margin - paired); weights / 1/B applied at finalize."""
    step = pl.program_id(0)

    @pl.when(step == 0)
    def _init():
        vis_acc_ref[...] = jnp.zeros_like(vis_acc_ref)
        text_acc_ref[...] = jnp.zeros_like(text_acc_ref)
        out_ref[...] = jnp.zeros_like(out_ref)

    base = margin - paired_ref[...].astype(jnp.float32)
    vis_hinge = jnp.maximum(vis_unp_ref[...].astype(jnp.float32) + base, 0.0)
    text_hinge = jnp.maximum(text_unp_ref[...].astype(jnp.float32) + base, 0.0)
    vis_acc_ref[...] += jnp.sum(vis_hinge, axis=0, keepdims=True)
    text_acc_ref[...] += jnp.sum(text_hinge, axis=0, keepdims=True)

    @pl.when(step == pl.num_programs(0) - 1)
    def _finalize():
        out_ref[...] = inv_b * (
            vis_weight * jnp.sum(vis_acc_ref[...], keepdims=True)
            + text_weight * jnp.sum(text_acc_ref[...], keepdims=True))


# --------------------------------------------------------------------------- #
# Tile-size selection
# --------------------------------------------------------------------------- #
_VMEM_INPUT_BUDGET = 8 * 1024 * 1024     # bytes per single buffer set (x2 pipelined)
_VMEM_LIMIT_BYTES = 32 * 1024 * 1024     # safe default on v5e/v6e/v7x


def _pick_block_rows(rows, n_inputs, bytes_per_row, requested=None):
    """Rows per grid step for the copy-free tiled path.

    Returns None when the tiled path is not possible (chunk row count not a
    multiple of the 8-row sublane granule) and the caller must fall back to
    full-extent per-chunk blocks.
    """
    if rows % 8 != 0:
        return None
    per_row = max(1, n_inputs * bytes_per_row)
    if (requested is not None and requested % 8 == 0 and rows % requested == 0
            and requested * per_row <= 2 * _VMEM_INPUT_BUDGET):
        return requested
    tb_cap = max(8, (_VMEM_INPUT_BUDGET // per_row) // 8 * 8)
    if rows <= tb_cap:
        return rows                       # whole chunk in one tile
    for cand in range(tb_cap, 7, -8):     # largest divisor of rows <= budget
        if rows % cand == 0:
            return cand
    return 8                              # unreachable: rows % 8 == 0


# --------------------------------------------------------------------------- #
# Wrapper
# --------------------------------------------------------------------------- #
class MaxMarginLoss:
    """JAX/Pallas port of the PyTorch MaxMarginLoss module (forward only)."""

    def __init__(self, margin: float, vis_rank_weight: float, text_rank_weight: float):
        self.margin = float(margin)
        self.vis_rank = vis_rank_weight > 0
        self.text_rank = text_rank_weight > 0
        self.vis_rank_weight = float(vis_rank_weight)
        self.text_rank_weight = float(text_rank_weight)

    def __call__(self, cossim: jnp.ndarray, *, block_rows=None) -> jnp.ndarray:
        if not (self.vis_rank or self.text_rank):
            # PyTorch forward would fail with B == 0 / undefined losses.
            raise ValueError("At least one of vis_rank / text_rank must be active.")

        if cossim.ndim == 1:
            cossim = cossim[:, None]                    # [batch] -> [batch, 1]
        elif cossim.ndim > 2:
            cossim = cossim.reshape(cossim.shape[0], -1)

        batch = cossim.shape[0]
        dual = self.vis_rank and self.text_rank
        n_chunks = 3 if dual else 2
        B = batch // n_chunks
        if B == 0:
            raise ValueError("cossim batch too small for the active ranks.")

        # Lane-dense repack for 1-D similarities: [batch, 1] -> [batch//128, 128]
        # is a free contiguous reshape and keeps DMA + VPU work lane-dense.
        if cossim.shape[1] == 1 and B % 128 == 0 and batch % 128 == 0:
            cossim = cossim.reshape(batch // 128, 128)
            rows = B // 128                             # rows per logical chunk
        else:
            rows = B
        D = cossim.shape[1]

        inv_b = 1.0 / B
        itemsize = jnp.dtype(cossim.dtype).itemsize

        if dual:
            kernel = functools.partial(
                _dual_rank_kernel,
                margin=self.margin,
                vis_weight=self.vis_rank_weight,
                text_weight=self.text_rank_weight,
                inv_b=inv_b,
            )
            scratch_shapes = [pltpu.VMEM((1, D), jnp.float32),
                              pltpu.VMEM((1, D), jnp.float32)]
        else:
            weight = self.vis_rank_weight if self.vis_rank else self.text_rank_weight
            kernel = functools.partial(
                _single_rank_kernel,
                margin=self.margin, weight=weight, inv_b=inv_b,
            )
            scratch_shapes = [pltpu.VMEM((1, D), jnp.float32)]

        flops = 5 * rows * D * (n_chunks - 1)
        bytes_accessed = n_chunks * rows * D * itemsize + 4

        tb = _pick_block_rows(rows, n_chunks, D * itemsize, block_rows)
        if tb is not None:
            # Tiled, copy-free path: read each chunk's tiles straight out of the
            # un-sliced cossim via block-index offsets.
            num_steps = rows // tb
            off = rows // tb                            # block-rows per chunk
            operands = [cossim, cossim]
            in_specs = [pl.BlockSpec((tb, D), lambda t: (t, 0)),          # paired
                        pl.BlockSpec((tb, D), lambda t: (t + off, 0))]    # (text) unpaired
            if dual:
                operands.append(cossim)
                in_specs.append(pl.BlockSpec((tb, D), lambda t: (t + 2 * off, 0)))  # vis unp
        else:
            # Fallback for chunk row counts that are not a multiple of 8: slice
            # each chunk in the wrapper (one small copy per chunk) and run a
            # single full-extent block, which satisfies the tiling constraint.
            num_steps = 1
            operands = [cossim[:rows], cossim[rows:2 * rows]]
            in_specs = [pl.BlockSpec((rows, D), lambda t: (0, 0)),
                        pl.BlockSpec((rows, D), lambda t: (0, 0))]
            if dual:
                operands.append(cossim[2 * rows:3 * rows])
                in_specs.append(pl.BlockSpec((rows, D), lambda t: (0, 0)))

        out = pl.pallas_call(
            kernel,
            out_shape=jax.ShapeDtypeStruct((1, 1), jnp.float32),
            grid=(num_steps,),
            in_specs=in_specs,
            out_specs=pl.BlockSpec((1, 1), lambda t: (0, 0)),
            scratch_shapes=scratch_shapes,
            compiler_params=pltpu.CompilerParams(
                dimension_semantics=("arbitrary",),
                vmem_limit_bytes=_VMEM_LIMIT_BYTES),
            cost_estimate=pl.CostEstimate(
                flops=flops, transcendentals=0, bytes_accessed=bytes_accessed),
        )(*operands)
        return out[0, 0]


# --------------------------------------------------------------------------- #
# Pure-JAX reference (mirrors the PyTorch forward)
# --------------------------------------------------------------------------- #
def _reference_loss(cossim, margin, vis_w, text_w):
    cossim = jnp.asarray(cossim, jnp.float32)
    if cossim.ndim == 1:
        cossim = cossim[:, None]
    batch = cossim.shape[0]
    vis_rank, text_rank = vis_w > 0, text_w > 0
    if vis_rank and text_rank:
        B = batch // 3
        paired = cossim[:B]
        text_unp = cossim[B:2 * B]
        vis_unp = cossim[2 * B:3 * B]
        vis_loss = vis_w * jnp.maximum(margin + vis_unp - paired, 0.0)
        text_loss = text_w * jnp.maximum(margin + text_unp - paired, 0.0)
        return (vis_loss + text_loss).sum() / B
    else:
        B = batch // 2
        paired = cossim[:B]
        unp = cossim[B:2 * B]
        w = vis_w if vis_rank else text_w
        return (w * jnp.maximum(margin + unp - paired, 0.0)).sum() / B


if __name__ == "__main__":
    margin, vis_w, text_w = 0.2, 1.0, 0.5
    keys = jax.random.split(jax.random.PRNGKey(0), 4)

    # 1) Dual-rank, tiled copy-free path with >1 grid step (B=16, block_rows=8).
    cossim = jax.random.uniform(keys[0], (48, 128), jnp.float32, -1.0, 1.0)
    loss = MaxMarginLoss(margin, vis_w, text_w)(cossim, block_rows=8)
    jax.block_until_ready(loss)
    ref = _reference_loss(cossim, margin, vis_w, text_w)
    assert jnp.allclose(loss, ref, rtol=1e-4, atol=1e-4), (loss, ref)

    # 2) Single-rank branches (vis-only / text-only), auto tile size (1 step).
    cossim2 = jax.random.uniform(keys[1], (32, 128), jnp.float32, -1.0, 1.0)
    l_vis = MaxMarginLoss(margin, 1.0, 0.0)(cossim2)
    l_txt = MaxMarginLoss(margin, 0.0, 0.75)(cossim2)
    assert jnp.allclose(l_vis, _reference_loss(cossim2, margin, 1.0, 0.0),
                        rtol=1e-4, atol=1e-4)
    assert jnp.allclose(l_txt, _reference_loss(cossim2, margin, 0.0, 0.75),
                        rtol=1e-4, atol=1e-4)

    # 3) Unaligned fallback path (B = 4 rows, not a multiple of 8).
    cossim3 = jax.random.uniform(keys[2], (12, 128), jnp.float32, -1.0, 1.0)
    l3 = MaxMarginLoss(margin, vis_w, text_w)(cossim3)
    assert jnp.allclose(l3, _reference_loss(cossim3, margin, vis_w, text_w),
                        rtol=1e-4, atol=1e-4)

    # 4) 1-D cossim (the common case) with lane-dense repack.
    cossim1d = jax.random.uniform(keys[3], (3 * 1024,), jnp.float32, -1.0, 1.0)
    l1d = MaxMarginLoss(margin, vis_w, text_w)(cossim1d)
    assert jnp.allclose(l1d, _reference_loss(cossim1d, margin, vis_w, text_w),
                        rtol=1e-4, atol=1e-4)

    jax.block_until_ready((l_vis, l_txt, l3, l1d))
    print("KERNEL_OK")
</pallas_src>

<mosaic_0001>
module attributes {stable_mosaic.version = 11 : i64} {
  func.func @_dual_rank_kernel(%arg0: i32, %arg1: memref<8x128xf32, #tpu.memory_space<vmem>>, %arg2: memref<8x128xf32, #tpu.memory_space<vmem>>, %arg3: memref<8x128xf32, #tpu.memory_space<vmem>>, %arg4: memref<1x1xf32, #tpu.memory_space<vmem>>, %arg5: memref<1x128xf32, #tpu.memory_space<vmem>>, %arg6: memref<1x128xf32, #tpu.memory_space<vmem>>) attributes {dimension_semantics = [#tpu.dimension_semantics<arbitrary>], iteration_bounds = array<i64: 2>, scalar_prefetch = 0 : i64, scratch_operands = 2 : i64, tpu.core_type = #tpu.core_type<tc>, window_params = [{transform_indices = @transform_0, window_bounds = array<i64: 8, 128>}, {transform_indices = @transform_1, window_bounds = array<i64: 8, 128>}, {transform_indices = @transform_2, window_bounds = array<i64: 8, 128>}, {pipeline_mode = #tpu.pipeline_mode<synchronous>, transform_indices = @transform_3, window_bounds = array<i64: 1, 1>}]} {
    %c0_i32 = arith.constant 0 : i32
    %0 = arith.cmpi eq, %arg0, %c0_i32 : i32
    %1 = arith.extui %0 : i1 to i32
    %c0_i32_0 = arith.constant 0 : i32
    %2 = arith.cmpi ne, %1, %c0_i32_0 : i32
    scf.if %2 {
      %cst_19 = arith.constant 0.000000e+00 : f32
      %27 = vector.broadcast %cst_19 : f32 to vector<1x128xf32>
      %c0_20 = arith.constant 0 : index
      %c0_21 = arith.constant 0 : index
      %28 = vector.load %arg5[%c0_20, %c0_21] : memref<1x128xf32, #tpu.memory_space<vmem>>, vector<1x128xf32>
      tpu.vector_store %arg5[%c0_20, %c0_21], %27 {strides = array<i32>} : memref<1x128xf32, #tpu.memory_space<vmem>>, vector<1x128xf32>,
      %cst_22 = arith.constant 0.000000e+00 : f32
      %29 = vector.broadcast %cst_22 : f32 to vector<1x128xf32>
      %c0_23 = arith.constant 0 : index
      %c0_24 = arith.constant 0 : index
      %30 = vector.load %arg6[%c0_23, %c0_24] : memref<1x128xf32, #tpu.memory_space<vmem>>, vector<1x128xf32>
      tpu.vector_store %arg6[%c0_23, %c0_24], %29 {strides = array<i32>} : memref<1x128xf32, #tpu.memory_space<vmem>>, vector<1x128xf32>,
      %cst_25 = arith.constant 0.000000e+00 : f32
      %31 = vector.broadcast %cst_25 : f32 to vector<1x1xf32>
      %c0_26 = arith.constant 0 : index
      %c0_27 = arith.constant 0 : index
      %32 = vector.load %arg4[%c0_26, %c0_27] : memref<1x1xf32, #tpu.memory_space<vmem>>, vector<1x1xf32>
      tpu.vector_store %arg4[%c0_26, %c0_27], %31 {strides = array<i32>} : memref<1x1xf32, #tpu.memory_space<vmem>>, vector<1x1xf32>,
    } else {
    }
    %c0 = arith.constant 0 : index
    %c0_1 = arith.constant 0 : index
    %3 = vector.load %arg1[%c0, %c0_1] : memref<8x128xf32, #tpu.memory_space<vmem>>, vector<8x128xf32>
    %cst = arith.constant 2.000000e-01 : f32
    %4 = vector.broadcast %cst : f32 to vector<8x128xf32>
    %5 = arith.subf %4, %3 : vector<8x128xf32>
    %c0_2 = arith.constant 0 : index
    %c0_3 = arith.constant 0 : index
    %6 = vector.load %arg3[%c0_2, %c0_3] : memref<8x128xf32, #tpu.memory_space<vmem>>, vector<8x128xf32>
    %7 = arith.addf %6, %5 : vector<8x128xf32>
    %cst_4 = arith.constant 0.000000e+00 : f32
    %8 = vector.broadcast %cst_4 : f32 to vector<8x128xf32>
    %9 = arith.maximumf %7, %8 : vector<8x128xf32>
    %c0_5 = arith.constant 0 : index
    %c0_6 = arith.constant 0 : index
    %10 = vector.load %arg2[%c0_5, %c0_6] : memref<8x128xf32, #tpu.memory_space<vmem>>, vector<8x128xf32>
    %11 = arith.addf %10, %5 : vector<8x128xf32>
    %cst_7 = arith.constant 0.000000e+00 : f32
    %12 = vector.broadcast %cst_7 : f32 to vector<8x128xf32>
    %13 = arith.maximumf %11, %12 : vector<8x128xf32>
    %c0_8 = arith.constant 0 : index
    %c0_9 = arith.constant 0 : index
    %14 = vector.load %arg5[%c0_8, %c0_9] : memref<1x128xf32, #tpu.memory_space<vmem>>, vector<1x128xf32>
    %cst_10 = arith.constant dense<0.000000e+00> : vector<128xf32>
    %15 = vector.multi_reduction <add>, %9, %cst_10 [0] : vector<8x128xf32> to vector<128xf32>
    %16 = vector.shape_cast %15 : vector<128xf32> to vector<1x128xf32>
    %17 = arith.addf %14, %16 : vector<1x128xf32>
    %c0_11 = arith.constant 0 : index
    %c0_12 = arith.constant 0 : index
    %18 = vector.load %arg5[%c0_11, %c0_12] : memref<1x128xf32, #tpu.memory_space<vmem>>, vector<1x128xf32>
    tpu.vector_store %arg5[%c0_11, %c0_12], %17 {strides = array<i32>} : memref<1x128xf32, #tpu.memory_space<vmem>>, vector<1x128xf32>,
    %c0_13 = arith.constant 0 : index
    %c0_14 = arith.constant 0 : index
    %19 = vector.load %arg6[%c0_13, %c0_14] : memref<1x128xf32, #tpu.memory_space<vmem>>, vector<1x128xf32>
    %cst_15 = arith.constant dense<0.000000e+00> : vector<128xf32>
    %20 = vector.multi_reduction <add>, %13, %cst_15 [0] : vector<8x128xf32> to vector<128xf32>
    %21 = vector.shape_cast %20 : vector<128xf32> to vector<1x128xf32>
    %22 = arith.addf %19, %21 : vector<1x128xf32>
    %c0_16 = arith.constant 0 : index
    %c0_17 = arith.constant 0 : index
    %23 = vector.load %arg6[%c0_16, %c0_17] : memref<1x128xf32, #tpu.memory_space<vmem>>, vector<1x128xf32>
    tpu.vector_store %arg6[%c0_16, %c0_17], %22 {strides = array<i32>} : memref<1x128xf32, #tpu.memory_space<vmem>>, vector<1x128xf32>,
    %c1_i32 = arith.constant 1 : i32
    %24 = arith.cmpi eq, %arg0, %c1_i32 : i32
    %25 = arith.extui %24 : i1 to i32
    %c0_i32_18 = arith.constant 0 : i32
    %26 = arith.cmpi ne, %25, %c0_i32_18 : i32
    scf.if %26 {
      %c0_19 = arith.constant 0 : index
      %c0_20 = arith.constant 0 : index
      %27 = vector.load %arg5[%c0_19, %c0_20] : memref<1x128xf32, #tpu.memory_space<vmem>>, vector<1x128xf32>
      %28 = vector.shape_cast %27 : vector<1x128xf32> to vector<1x1x128xf32>
      %cst_21 = arith.constant dense<0.000000e+00> : vector<1xf32>
      %29 = vector.multi_reduction <add>, %28, %cst_21 [1, 2] : vector<1x1x128xf32> to vector<1xf32>
      %30 = vector.shape_cast %29 : vector<1xf32> to vector<1x1x1xf32>
      %31 = vector.extract %30[0, 0, 0] : f32 from vector<1x1x1xf32>
      %32 = vector.broadcast %31 : f32 to vector<1x1xf32>
      %cst_22 = arith.constant 1.000000e+00 : f32
      %33 = vector.broadcast %cst_22 : f32 to vector<1x1xf32>
      %34 = arith.mulf %33, %32 : vector<1x1xf32>
      %c0_23 = arith.constant 0 : index
      %c0_24 = arith.constant 0 : index
      %35 = vector.load %arg6[%c0_23, %c0_24] : memref<1x128xf32, #tpu.memory_space<vmem>>, vector<1x128xf32>
      %36 = vector.shape_cast %35 : vector<1x128xf32> to vector<1x1x128xf32>
      %cst_25 = arith.constant dense<0.000000e+00> : vector<1xf32>
      %37 = vector.multi_reduction <add>, %36, %cst_25 [1, 2] : vector<1x1x128xf32> to vector<1xf32>
      %38 = vector.shape_cast %37 : vector<1xf32> to vector<1x1x1xf32>
      %39 = vector.extract %38[0, 0, 0] : f32 from vector<1x1x1xf32>
      %40 = vector.broadcast %39 : f32 to vector<1x1xf32>
      %cst_26 = arith.constant 5.000000e-01 : f32
      %41 = vector.broadcast %cst_26 : f32 to vector<1x1xf32>
      %42 = arith.mulf %41, %40 : vector<1x1xf32>
      %43 = arith.addf %34, %42 : vector<1x1xf32>
      %cst_27 = arith.constant 6.250000e-02 : f32
      %44 = vector.broadcast %cst_27 : f32 to vector<1x1xf32>
      %45 = arith.mulf %44, %43 : vector<1x1xf32>
      %c0_28 = arith.constant 0 : index
      %c0_29 = arith.constant 0 : index
      %46 = vector.load %arg4[%c0_28, %c0_29] : memref<1x1xf32, #tpu.memory_space<vmem>>, vector<1x1xf32>
      tpu.vector_store %arg4[%c0_28, %c0_29], %45 {strides = array<i32>} : memref<1x1xf32, #tpu.memory_space<vmem>>, vector<1x1xf32>,
    } else {
    }
    return
  }
  func.func @transform_0(%arg0: i32) -> (i32, i32) {
    %c0_i32 = arith.constant 0 : i32
    %c0_i32_0 = arith.constant 0 : i32
    return %arg0, %c0_i32 : i32, i32
  }
  func.func @transform_1(%arg0: i32) -> (i32, i32) {
    %c2_i32 = arith.constant 2 : i32
    %0 = arith.addi %arg0, %c2_i32 : i32
    %c0_i32 = arith.constant 0 : i32
    %c0_i32_0 = arith.constant 0 : i32
    return %0, %c0_i32 : i32, i32
  }
  func.func @transform_2(%arg0: i32) -> (i32, i32) {
    %c4_i32 = arith.constant 4 : i32
    %0 = arith.addi %arg0, %c4_i32 : i32
    %c0_i32 = arith.constant 0 : i32
    %c0_i32_0 = arith.constant 0 : i32
    return %0, %c0_i32 : i32, i32
  }
  func.func @transform_3(%arg0: i32) -> (i32, i32) {
    %c0_i32 = arith.constant 0 : i32
    %c0_i32_0 = arith.constant 0 : i32
    %c0_i32_1 = arith.constant 0 : i32
    return %c0_i32, %c0_i32_0 : i32, i32
  }
}

</mosaic_0001>

<llo_original>
// kernel: tpu_custom_call.1
$region0: #{tpu_custom_call.1}
  #allocation0 [shape = 'u32[]', space=smem, size = 0x4, offset = 0x4, fixed_abs, tag = 'smem constant byte address 0x4 - core index']
  #allocation1 [shape = 'u32[144,128]{1,0:T(1,128)}', space=vmem, size = 0x12000, scoped, tag = 'internal scratch']
  #allocation2 [shape = 'f32[1,128]{1,0:T(1,128)}', space=vmem, size = 0x200, scoped, tag = 'scratch operand']
  #allocation3 [shape = 'f32[1,128]{1,0:T(1,128)}', space=vmem, size = 0x200, scoped, tag = 'scratch operand']
  %s0 = inlined_call_operand.hbm [shape: f32[48,128], index: 0, kind: input, shape index: {}]
  %s1 = inlined_call_operand.hbm [shape: f32[48,128], index: 1, kind: input, shape index: {}]
  %s2 = inlined_call_operand.hbm [shape: f32[48,128], index: 2, kind: input, shape index: {}]
  %s3 = inlined_call_operand.hbm [shape: f32[1,1], index: 3, kind: output, shape index: {}]
  %s4 = sld [smem:[#allocation0]]
  $region65: #{tpu_custom_call.1} parent=0
    _
  %s6 = ssub.s32 1, %s4
  %s7 = scalar_select 0, %s6, %s4
  $region1: #{tpu_custom_call.1} parent=0
    #allocation4 [shape = 'u8[8192]{0}', space=vmem, size = 0x2000, scoped, tag = 'input window, operand 0']
    #allocation5 [shape = 's32[2]{0}', space=sflag, size = 0x8, scoped, tag = 'scoped memory for tpu_custom_call.1']
    #allocation6 [shape = 's32[2]{0}', space=sflag, size = 0x8, scoped, tag = 'scoped memory for tpu_custom_call.1']
    #allocation7 [shape = 'u8[8192]{0}', space=vmem, size = 0x2000, scoped, tag = 'input window, operand 1']
    #allocation8 [shape = 's32[2]{0}', space=sflag, size = 0x8, scoped, tag = 'scoped memory for tpu_custom_call.1']
    #allocation9 [shape = 'u8[8192]{0}', space=vmem, size = 0x2000, scoped, tag = 'input window, operand 2']
    #allocation10 [shape = 'u8[512]{0}', space=vmem, size = 0x400, scoped, tag = 'output window, operand 0, single buffered']
    %8 = vsyncpa [#allocation5], 0
    %s9 = scalar_lea.sflag [#allocation5], 1
    %10 = vsyncpa %s9, 0
    %11 = vsyncpa [#allocation8], 0
    %s12 = scalar_lea.sflag [#allocation8], 1
    %13 = vsyncpa %s12, 0
    %14 = vsyncpa [#allocation6], 0
    loop: start=0, step=1, limit=4
    $region2: #{tpu_custom_call.1} parent=1 // loop_pre_header
      _
    $region3: #{tpu_custom_call.1} parent=1 // loop_header
      %s16 = sphi 0, %s20
      %p17 = scmp.ge.s32.totalorder %s16, 4
      %s26 = sphi 0, %s28
      %s29 = sphi 0, %s26
      %s30 = sphi 0, %s29
      %s46 = sphi 0, %s30
      %s54 = sphi 0, %s56
      %s57 = sphi 0, %s54
      %s58 = sphi 0, %s57
      %s74 = sphi 0, %s58
      %s82 = sphi 0, %s84
      %s85 = sphi 0, %s82
      %s86 = sphi 0, %s85
      %s102 = sphi 0, %s86
      %s106 = sphi 0, %s106
      %s108 = sphi 0, %s106
      %s109 = sphi 0, %s108
      %s123 = sphi 0, %s109
    $region4: #{tpu_custom_call.1} parent=1 // loop_header_branch
      %19 = sbr.rel (%p17) target = $region8
    $region5: #{tpu_custom_call.1} parent=1 // loop_body
      %s21 = ssub.s32 %s16, 1
      %s22 = ssub.s32 %s16, 2
      %s23 = sadd.s32 %s16, 1
      %s24 = ssub.s32 %s16, %s23
      %p25 = scmp.eq.s32.totalorder %s24, 0
      %s27 = sadd.s32 %s26, 1
      %s28 = scalar_select %p25, %s26, %s27
      %p31 = pneg %p25
      %p32 = scmp.eq.s32.totalorder %s16, 1
      %p33 = por %p31, %p32
      %p34 = scmp.ne.s32.totalorder %s26, %s29
      %p35 = scmp.eq.s32.totalorder %s16, 0
      %p36 = por %p34, %p35
      %p37 = scmp.ne.s32.totalorder %s26, %s29
      %p38 = scmp.eq.s32.totalorder %s21, 1
      %p39 = por %p37, %p38
      %p40 = scmp.ne.s32.totalorder %s29, %s30
      %p41 = scmp.eq.s32.totalorder %s21, 0
      %p42 = por %p40, %p41
      %p43 = scmp.ne.s32.totalorder %s29, %s30
      %p44 = scmp.eq.s32.totalorder %s22, 1
      %p45 = por %p43, %p44
      %p47 = scmp.ne.s32.totalorder %s30, %s46
      %p48 = scmp.eq.s32.totalorder %s22, 0
      %p49 = por %p47, %p48
      %s50 = sadd.s32 %s16, 2
      %s51 = sadd.s32 %s23, 2
      %s52 = ssub.s32 %s50, %s51
      %p53 = scmp.eq.s32.totalorder %s52, 0
      %s55 = sadd.s32 %s54, 1
      %s56 = scalar_select %p53, %s54, %s55
      %p59 = pneg %p53
      %p60 = scmp.eq.s32.totalorder %s16, 1
      %p61 = por %p59, %p60
      %p62 = scmp.ne.s32.totalorder %s54, %s57
      %p63 = scmp.eq.s32.totalorder %s16, 0
      %p64 = por %p62, %p63
      %p65 = scmp.ne.s32.totalorder %s54, %s57
      %p66 = scmp.eq.s32.totalorder %s21, 1
      %p67 = por %p65, %p66
      %p68 = scmp.ne.s32.totalorder %s57, %s58
      %p69 = scmp.eq.s32.totalorder %s21, 0
      %p70 = por %p68, %p69
      %p71 = scmp.ne.s32.totalorder %s57, %s58
      %p72 = scmp.eq.s32.totalorder %s22, 1
      %p73 = por %p71, %p72
      %p75 = scmp.ne.s32.totalorder %s58, %s74
      %p76 = scmp.eq.s32.totalorder %s22, 0
      %p77 = por %p75, %p76
      %s78 = sadd.s32 %s16, 4
      %s79 = sadd.s32 %s23, 4
      %s80 = ssub.s32 %s78, %s79
      %p81 = scmp.eq.s32.totalorder %s80, 0
      %s83 = sadd.s32 %s82, 1
      %s84 = scalar_select %p81, %s82, %s83
      %p87 = pneg %p81
      %p88 = scmp.eq.s32.totalorder %s16, 1
      %p89 = por %p87, %p88
      %p90 = scmp.ne.s32.totalorder %s82, %s85
      %p91 = scmp.eq.s32.totalorder %s16, 0
      %p92 = por %p90, %p91
      %p93 = scmp.ne.s32.totalorder %s82, %s85
      %p94 = scmp.eq.s32.totalorder %s21, 1
      %p95 = por %p93, %p94
      %p96 = scmp.ne.s32.totalorder %s85, %s86
      %p97 = scmp.eq.s32.totalorder %s21, 0
      %p98 = por %p96, %p97
      %p99 = scmp.ne.s32.totalorder %s85, %s86
      %p100 = scmp.eq.s32.totalorder %s22, 1
      %p101 = por %p99, %p100
      %p103 = scmp.ne.s32.totalorder %s86, %s102
      %p104 = scmp.eq.s32.totalorder %s22, 0
      %p105 = por %p103, %p104
      %s107 = sadd.s32 %s106, 1
      %p110 = scmp.eq.s32.totalorder %s16, 1
      %p111 = scmp.ne.s32.totalorder %s106, %s108
      %p112 = scmp.eq.s32.totalorder %s16, 0
      %p113 = por %p111, %p112
      %p114 = scmp.ne.s32.totalorder %s106, %s108
      %p115 = scmp.eq.s32.totalorder %s21, 1
      %p116 = por %p114, %p115
      %p117 = scmp.ne.s32.totalorder %s108, %s109
      %p118 = scmp.eq.s32.totalorder %s21, 0
      %p119 = por %p117, %p118
      %p120 = scmp.ne.s32.totalorder %s108, %s109
      %p121 = scmp.eq.s32.totalorder %s22, 1
      %p122 = por %p120, %p121
      %p124 = scmp.ne.s32.totalorder %s109, %s123
      %p125 = scmp.eq.s32.totalorder %s22, 0
      %p126 = por %p124, %p125
      %p127 = scmp.le.s32.totalorder 1, %s16
      %p128 = scmp.lt.s32.totalorder %s16, 3
      %p129 = pnand %p127, %p128
      %p130 = pneg %p129
      // Predicated region
      $region9: #{tpu_custom_call.1} parent=5 // pred_check
        _
      $region10: #{tpu_custom_call.1} parent=5 // pred_check_branch
        %132 = sbr.rel (%p129) target = $region12
      $region11: #{tpu_custom_call.1} parent=5 // pred_region
        %s133 = ssub.s32 %s16, 1
      $region12: #{tpu_custom_call.1} parent=5 // pred_fallthru
        _
      %p134 = scmp.lt.s32.totalorder %s16, 2
      // Predicated region
      $region13: #{tpu_custom_call.1} parent=5 // pred_check
        %p135 = pneg %p134
      $region14: #{tpu_custom_call.1} parent=5 // pred_check_branch
        %137 = sbr.rel (%p135) target = $region16
      $region15: #{tpu_custom_call.1} parent=5 // pred_region
        // Predicated region
        $region17: #{tpu_custom_call.1} parent=15 // pred_check
          %p138 = pneg %p36
        $region18: #{tpu_custom_call.1} parent=15 // pred_check_branch
          %140 = sbr.rel (%p138) target = $region20
        $region19: #{tpu_custom_call.1} parent=15 // pred_region
          %s141 = sand.u32 %s26, 1
          %s142 = scalar_lea.sflag [#allocation5], %s141
          %s143 = sand.u32 %s26, 1
          %s144 = smul.addr %s143, 8
          %s145 = scalar_lea.vmem [#allocation4], %s144
          %s147 = ssub.s32 128, 128
          %148 = vsyncadd %s142, %s147
          %s149 = smul.addr %s16, 128
          %s150 = scalar_lea.hbm %s0, %s149
          %s152 = sshll.u32 %s145, 4
          %s153 = int_to_ptr.vmem [resolvable:$true] %s152
          %155 = dma.hbm_to_vmem [thread:$0]  %s150, 128, %s153, %s142
        $region20: #{tpu_custom_call.1} parent=15 // pred_fallthru
          _
        // Predicated region
        $region21: #{tpu_custom_call.1} parent=15 // pred_check
          %p156 = pneg %p64
        $region22: #{tpu_custom_call.1} parent=15 // pred_check_branch
          %158 = sbr.rel (%p156) target = $region24
        $region23: #{tpu_custom_call.1} parent=15 // pred_region
          %s159 = sand.u32 %s16, 1
          %s160 = scalar_lea.sflag [#allocation8], %s159
          %s161 = sand.u32 %s54, 1
          %s162 = smul.addr %s161, 8
          %s163 = scalar_lea.vmem [#allocation7], %s162
          %s164 = sadd.s32 %s16, 2
          %s166 = ssub.s32 128, 128
          %167 = vsyncadd %s160, %s166
          %s168 = smul.addr %s164, 128
          %s169 = scalar_lea.hbm %s1, %s168
          %s171 = sshll.u32 %s163, 4
          %s172 = int_to_ptr.vmem [resolvable:$true] %s171
          %174 = dma.hbm_to_vmem [thread:$0]  %s169, 128, %s172, %s160
        $region24: #{tpu_custom_call.1} parent=15 // pred_fallthru
          _
        // Predicated region
        $region25: #{tpu_custom_call.1} parent=15 // pred_check
          %p175 = pneg %p92
        $region26: #{tpu_custom_call.1} parent=15 // pred_check_branch
          %177 = sbr.rel (%p175) target = $region28
        $region27: #{tpu_custom_call.1} parent=15 // pred_region
          %s178 = sand.u32 %s16, 1
          %s179 = scalar_lea.sflag [#allocation8], %s178
          %s180 = sand.u32 %s82, 1
          %s181 = smul.addr %s180, 8
          %s182 = scalar_lea.vmem [#allocation9], %s181
          %s183 = sadd.s32 %s16, 4
          %s185 = ssub.s32 128, 128
          %186 = vsyncadd %s179, %s185
          %s187 = smul.addr %s183, 128
          %s188 = scalar_lea.hbm %s2, %s187
          %s190 = sshll.u32 %s182, 4
          %s191 = int_to_ptr.vmem [resolvable:$true] %s190
          %193 = dma.hbm_to_vmem [thread:$0]  %s188, 128, %s191, %s179
        $region28: #{tpu_custom_call.1} parent=15 // pred_fallthru
          _
      $region16: #{tpu_custom_call.1} parent=5 // pred_fallthru
        _
      %p194 = scmp.le.s32.totalorder 1, %s16
      %p195 = scmp.lt.s32.totalorder %s16, 3
      %p196 = pnand %p194, %p195
      %p197 = pneg %p196
      // Predicated region
      $region29: #{tpu_custom_call.1} parent=5 // pred_check
        _
      $region30: #{tpu_custom_call.1} parent=5 // pred_check_branch
        %199 = sbr.rel (%p196) target = $region32
      $region31: #{tpu_custom_call.1} parent=5 // pred_region
        %s200 = ssub.s32 %s16, 1
        %s201 = sand.u32 %s29, 1
        %s202 = scalar_lea.sflag [#allocation5], %s201
        %s203 = sand.u32 %s29, 1
        %s204 = smul.addr %s203, 8
        %s205 = scalar_lea.vmem [#allocation4], %s204
        // Predicated region
        $region33: #{tpu_custom_call.1} parent=31 // pred_check
          %p206 = pneg %p42
        $region34: #{tpu_custom_call.1} parent=31 // pred_check_branch
          %208 = sbr.rel (%p206) target = $region36
        $region35: #{tpu_custom_call.1} parent=31 // pred_region
          %209 = dma.done %s202, 128
        $region36: #{tpu_custom_call.1} parent=31 // pred_fallthru
          _
        %s210 = sand.u32 %s21, 1
        %s211 = scalar_lea.sflag [#allocation8], %s210
        %s212 = sand.u32 %s57, 1
        %s213 = smul.addr %s212, 8
        %s214 = scalar_lea.vmem [#allocation7], %s213
        // Predicated region
        $region37: #{tpu_custom_call.1} parent=31 // pred_check
          %p215 = pneg %p70
        $region38: #{tpu_custom_call.1} parent=31 // pred_check_branch
          %217 = sbr.rel (%p215) target = $region40
        $region39: #{tpu_custom_call.1} parent=31 // pred_region
          %218 = dma.done %s211, 128
        $region40: #{tpu_custom_call.1} parent=31 // pred_fallthru
          _
        %s219 = sand.u32 %s21, 1
        %s220 = scalar_lea.sflag [#allocation8], %s219
        %s221 = sand.u32 %s85, 1
        %s222 = smul.addr %s221, 8
        %s223 = scalar_lea.vmem [#allocation9], %s222
        // Predicated region
        $region41: #{tpu_custom_call.1} parent=31 // pred_check
          %p224 = pneg %p98
        $region42: #{tpu_custom_call.1} parent=31 // pred_check_branch
          %226 = sbr.rel (%p224) target = $region44
        $region43: #{tpu_custom_call.1} parent=31 // pred_region
          %227 = dma.done %s220, 128
        $region44: #{tpu_custom_call.1} parent=31 // pred_fallthru
          _
        %s228 = sand.u32 %s29, 1
        %s229 = scalar_lea.sflag [#allocation5], %s228
        %s230 = sand.u32 %s29, 1
        %s231 = smul.addr %s230, 8
        %s232 = scalar_lea.vmem [#allocation4], %s231
        %p233 = pneg %p42
        %p234 = pneg %p39
        %s235 = sand.u32 %s21, 1
        %s236 = scalar_lea.sflag [#allocation8], %s235
        %s237 = sand.u32 %s57, 1
        %s238 = smul.addr %s237, 8
        %s239 = scalar_lea.vmem [#allocation7], %s238
        %p240 = pneg %p70
        %p241 = pneg %p67
        %s242 = sand.u32 %s21, 1
        %s243 = scalar_lea.sflag [#allocation8], %s242
        %s244 = sand.u32 %s85, 1
        %s245 = smul.addr %s244, 8
        %s246 = scalar_lea.vmem [#allocation9], %s245
        %p247 = pneg %p98
        %p248 = pneg %p95
        %p249 = pneg %p119
        %p250 = pneg %p116
        %s251 = sadd.s32 %s21, 2
        %s252 = sadd.s32 %s21, 4
        %p253 = scmp.eq.s32.totalorder %s21, 0
        // Predicated region
        $region45: #{tpu_custom_call.1} parent=31 // pred_check
          %p254 = pneg %p253
        $region46: #{tpu_custom_call.1} parent=31 // pred_check_branch
          %256 = sbr.rel (%p254) target = $region48
        $region47: #{tpu_custom_call.1} parent=31 // pred_region
          %257 = vst [vmem:[#allocation2] sm:$0x1] 0.0
          %258 = vst [vmem:[#allocation3] sm:$0x1] 0.0
          %vm259 = vcmask 0
          %260 = vst.msk [vmem:[#allocation10] sm:$0x1] %vm259, 0.0
        $region48: #{tpu_custom_call.1} parent=31 // pred_fallthru
          _
        %v261 = vld [vmem:[%s205] sm:$0xff]
        %v262 = vsub.f32 0.2, %v261
        %v263 = vld [vmem:[%s223] sm:$0xff]
        %v264 = vadd.f32 %v263, %v262
        %v265 = vmax.f32 %v264, 0.0
        %v266 = vld [vmem:[%s214] sm:$0xff]
        %v267 = vadd.f32 %v266, %v262
        %v268 = vmax.f32 %v267, 0.0
        %v269 = vld [vmem:[#allocation2] sm:$0x1]
        %v270 = vrot.slane %v265, 4
        %v271 = vadd.f32 %v265, %v270
        %v272 = vrot.slane %v271, 2
        %v273 = vadd.f32 %v271, %v272
        %v274 = vrot.slane %v273, 1
        %v275 = vadd.f32 %v273, %v274
        %v276 = vadd.f32 %v269, %v275
        %277 = vst [vmem:[#allocation2] sm:$0x1] %v276
        %v278 = vld [vmem:[#allocation3] sm:$0x1]
        %v279 = vrot.slane %v268, 4
        %v280 = vadd.f32 %v268, %v279
        %v281 = vrot.slane %v280, 2
        %v282 = vadd.f32 %v280, %v281
        %v283 = vrot.slane %v282, 1
        %v284 = vadd.f32 %v282, %v283
        %v285 = vadd.f32 %v278, %v284
        %286 = vst [vmem:[#allocation3] sm:$0x1] %v285
        %p287 = scmp.eq.s32.totalorder %s21, 1
        // Predicated region
        $region49: #{tpu_custom_call.1} parent=31 // pred_check
          %p288 = pneg %p287
        $region50: #{tpu_custom_call.1} parent=31 // pred_check_branch
          %290 = sbr.rel (%p288) target = $region52
        $region51: #{tpu_custom_call.1} parent=31 // pred_region
          %v291 = vld [vmem:[#allocation2] sm:$0x1]
          %vm292 = vcmask 1040384
          %v293 = vsel %vm292, %v291, 0.0
          %294 = vadd.xlane.f32.xlu0 %v293
          %v295 = vpop.xlane.xlu0 %294
          %v296 = vrot.slane %v295, 4
          %v297 = vadd.f32 %v295, %v296
          %v298 = vrot.slane %v297, 2
          %v299 = vadd.f32 %v297, %v298
          %v300 = vrot.slane %v299, 1
          %v301 = vadd.f32 %v299, %v300
          %s302 = vtos %v301
          %v303 = vstv %s302
          %v304 = vld [vmem:[#allocation3] sm:$0x1]
          %v305 = vsel %vm292, %v304, 0.0
          %306 = vadd.xlane.f32.xlu0 %v305
          %v307 = vpop.xlane.xlu0 %306
          %v308 = vrot.slane %v307, 4
          %v309 = vadd.f32 %v307, %v308
          %v310 = vrot.slane %v309, 2
          %v311 = vadd.f32 %v309, %v310
          %v312 = vrot.slane %v311, 1
          %v313 = vadd.f32 %v311, %v312
          %s314 = vtos %v313
          %v315 = vstv %s314
          %v316 = vmul.f32 %v315, 0.5
          %v317 = vadd.f32 %v303, %v316
          %v318 = vmul.f32 %v317, 0.0625
          %vm319 = vcmask 0
          %320 = vst.msk [vmem:[#allocation10] sm:$0x1] %vm319, %v318
        $region52: #{tpu_custom_call.1} parent=31 // pred_fallthru
          _
        // Predicated region
        $region53: #{tpu_custom_call.1} parent=31 // pred_check
          %p321 = pneg %p116
        $region54: #{tpu_custom_call.1} parent=31 // pred_check_branch
          %323 = sbr.rel (%p321) target = $region56
        $region55: #{tpu_custom_call.1} parent=31 // pred_region
          %s325 = ssub.s32 16, 16
          %326 = vsyncadd [#allocation6], %s325
          %s328 = sshll.u32 [#allocation10], 4
          %s329 = int_to_ptr.vmem [resolvable:$true] %s328
          %331 = dma.vmem_to_hbm [thread:$0]  %s329, 16, %s3, [#allocation6]
        $region56: #{tpu_custom_call.1} parent=31 // pred_fallthru
          _
        // Predicated region
        $region57: #{tpu_custom_call.1} parent=31 // pred_check
          %p332 = pneg %p116
        $region58: #{tpu_custom_call.1} parent=31 // pred_check_branch
          %334 = sbr.rel (%p332) target = $region60
        $region59: #{tpu_custom_call.1} parent=31 // pred_region
          %335 = dma.done [#allocation6], 16
        $region60: #{tpu_custom_call.1} parent=31 // pred_fallthru
          _
      $region32: #{tpu_custom_call.1} parent=5 // pred_fallthru
        _
      %p336 = scmp.le.s32.totalorder 2, %s16
      // Predicated region
      $region61: #{tpu_custom_call.1} parent=5 // pred_check
        %p337 = pneg %p336
      $region62: #{tpu_custom_call.1} parent=5 // pred_check_branch
        %339 = sbr.rel (%p337) target = $region64
      $region63: #{tpu_custom_call.1} parent=5 // pred_region
        %s340 = ssub.s32 %s16, 2
      $region64: #{tpu_custom_call.1} parent=5 // pred_fallthru
        _
    $region6: #{tpu_custom_call.1} parent=1 // loop_footer
      %s20 = sadd.s32 1, %s16
    $region7: #{tpu_custom_call.1} parent=1 // loop_footer_branch
      %15 = sbr.rel target = $region3
    $region8: #{tpu_custom_call.1} parent=1 // loop_exit
      _
    %341 = vsyncpa [#allocation5], 1
    %s342 = scalar_lea.sflag [#allocation5], 1
    %343 = vsyncpa %s342, 1
    %344 = vsyncpa [#allocation8], 1
    %s345 = scalar_lea.sflag [#allocation8], 1
    %346 = vsyncpa %s345, 1
    %347 = vsyncpa [#allocation6], 1
    %s348 = scalar_lea.sflag [#allocation6], 1
    %349 = vsyncpa %s348, 1

</llo_original>
